<compile_context>
chip_gen: v7x
topology: tpu7x:2x2x1
jax: 0.10.0
libtpu: 0.0.40
codegen_flags: <defaults>
</compile_context>

<pallas_src>
import functools

import numpy as np
import jax
import jax.numpy as jnp
from jax import lax
from jax.experimental import pallas as pl
from jax.experimental.pallas import tpu as pltpu


# ----------------------------- hardware-aware sizing -----------------------------

def _vmem_limit_bytes():
    """Generation-aware VMEM budget (~7/8 of physical capacity).

    v7x (64 MiB/TC) -> 56 MiB, v5e/v6e (128 MiB) -> 112 MiB.  Falls back to a
    conservative 56 MiB if the hardware query is unavailable.
    """
    default_cap = 64 * 1024 * 1024
    try:
        info = pltpu.get_tpu_info()
        cap = int(getattr(info, "vmem_capacity_bytes", default_cap))
    except Exception:  # e.g. interpret mode / non-TPU trace host
        cap = default_cap
    return max(cap * 7 // 8, 32 * 1024 * 1024)


def _pick_tile(n, target, multiple, max_full=2048):
    """Largest tile <= target that divides n and is a multiple of `multiple`.

    `multiple` is 16 for bf16 (two rows per sublane) and 8 for f32.  If n <= target
    the full dim is used (always a legal block).  If no aligned divisor exists we
    only fall back to the full dim when it is small enough not to blow VMEM.
    """
    if n <= target:
        return n
    start = target - (target % multiple)
    for t in range(start, multiple - 1, -multiple):
        if n % t == 0:
            return t
    if n <= max_full:
        return n
    raise ValueError(
        f"sequence length {n} has no tile that is a multiple of {multiple} and "
        f"<= {target}; pad the sequence or adjust tile targets")


def _block_spec(shape, index_map, buffer_count=None):
    """BlockSpec with optional explicit buffer depth (robust to older jax)."""
    buffered = getattr(pl, "Buffered", None)
    if buffer_count is not None and buffered is not None:
        try:
            return pl.BlockSpec(shape, index_map,
                                pipeline_mode=buffered(buffer_count))
        except TypeError:
            pass
    return pl.BlockSpec(shape, index_map)


# --------------------------- stage 1: Q/K/V projections ---------------------------

def _qkv_proj_kernel(x_ref, wq_ref, wk_ref, wv_ref, bq_ref, bk_ref, bv_ref,
                     q_ref, k_ref, v_ref):
    """One grid step == (batch b, sequence tile si).

    x_ref   : (1, ts, Dp) input tile (compute dtype)
    w*_ref  : (Dp, Dp)    pre-transposed Linear weights (y = x @ w); wq pre-scaled
    b*_ref  : (1, Dp)     f32 biases (bq pre-scaled by 1/sqrt(D))
    q/k/v_ref: (1, ts, Dp) projected outputs in compute dtype
    """
    x = x_ref[0]
    q_ref[0] = (jnp.dot(x, wq_ref[...], preferred_element_type=jnp.float32)
                + bq_ref[...]).astype(q_ref.dtype)
    k_ref[0] = (jnp.dot(x, wk_ref[...], preferred_element_type=jnp.float32)
                + bk_ref[...]).astype(k_ref.dtype)
    v_ref[0] = (jnp.dot(x, wv_ref[...], preferred_element_type=jnp.float32)
                + bv_ref[...]).astype(v_ref.dtype)


# --------------------------- stage 2: flash attention -----------------------------

def _flash_attn_kernel(q_ref, k_ref, v_ref, o_ref, m_scr, l_scr, acc_scr,
                       *, approx_recip):
    """One grid step == (batch b, query tile qi, key/value tile ki).

    q_ref  : (1, tq, Dp) projected, pre-scaled queries (compute dtype)
    k_ref  : (1, tk, Dp) projected keys
    v_ref  : (1, tk, Dp) projected values
    o_ref  : (1, tq, Dp) output tile (written on the last kv step)
    m_scr, l_scr : (tq, 1) f32 online-softmax running max / running sum
    acc_scr: (tq, Dp) f32 running weighted sum of values
    """
    ki = pl.program_id(2)

    @pl.when(ki == 0)
    def _():
        m_scr[...] = jnp.full(m_scr.shape, -jnp.inf, dtype=m_scr.dtype)
        l_scr[...] = jnp.zeros(l_scr.shape, dtype=l_scr.dtype)
        acc_scr[...] = jnp.zeros(acc_scr.shape, dtype=acc_scr.dtype)

    q = q_ref[0]
    k = k_ref[0]
    v = v_ref[0]

    # scores = q @ k^T via NT-form dot_general (no explicit transpose / XLU shuffle)
    s = lax.dot_general(q, k, (((1,), (1,)), ((), ())),
                        preferred_element_type=jnp.float32)        # (tq, tk) f32

    # online-softmax update (f32 on VPU/EUP)
    m_prev = m_scr[...]
    m_new = jnp.maximum(m_prev, jnp.max(s, axis=-1, keepdims=True))
    alpha = jnp.exp(m_prev - m_new)
    p = jnp.exp(s - m_new)
    l_scr[...] = alpha * l_scr[...] + jnp.sum(p, axis=-1, keepdims=True)
    acc_scr[...] = alpha * acc_scr[...] + jnp.dot(
        p.astype(v.dtype), v, preferred_element_type=jnp.float32)
    m_scr[...] = m_new

    @pl.when(ki == pl.num_programs(2) - 1)
    def _():
        inv_l = pl.reciprocal(l_scr[...], approx=approx_recip)
        o_ref[0] = (acc_scr[...] * inv_l).astype(o_ref.dtype)


# ----------------------------------- wrapper --------------------------------------

def self_attention(x, wq, bq, wk, bk, wv, bv, *,
                   compute_dtype=jnp.bfloat16,
                   tq_target=None, tk_target=None, ts_target=512):
    """x: (B, S, D).  w*: (D, D) PyTorch-style (out, in).  b*: (D,)."""
    B, S, D = x.shape
    scale = 1.0 / (D ** 0.5)

    cdt = np.dtype(compute_dtype)
    cbytes = cdt.itemsize
    row_mult = 16 if cbytes < 4 else 8           # bf16 packs two rows per sublane

    # Pad feature dim to a lane-dense multiple of 128 (exact: padded cols are zero).
    Dp = ((D + 127) // 128) * 128
    pad = Dp - D

    def prep_w(w, s=1.0):
        wt = w.T * s
        if pad:
            wt = jnp.pad(wt, ((0, pad), (0, pad)))
        return wt.astype(compute_dtype)

    def prep_b(b, s=1.0):
        bb = (b * s).astype(jnp.float32)
        if pad:
            bb = jnp.pad(bb, ((0, pad),))
        return bb.reshape(1, Dp)

    # TODO(synk): for very large D (>= ~4096) add a K-tiling grid axis over the
    # (Dp, Dp) projection weights instead of keeping them whole-block resident.
    wqp, wkp, wvp = prep_w(wq, scale), prep_w(wk), prep_w(wv)   # scale folded into wq
    bqp, bkp, bvp = prep_b(bq, scale), prep_b(bk), prep_b(bv)   # ... and into bq
    xp = (jnp.pad(x, ((0, 0), (0, 0), (0, pad))) if pad else x).astype(compute_dtype)

    vmem_limit = _vmem_limit_bytes()
    big_vmem = vmem_limit >= 96 * 1024 * 1024
    if tq_target is None:
        tq_target = 512
    if tk_target is None:
        tk_target = 1024 if big_vmem else 512    # amortize per-step softmax epilogue

    # ------------------- stage 1: Q/K/V projections (hoisted, run once) ------------
    ts = _pick_tile(S, ts_target, row_mult)
    proj_cost = pl.CostEstimate(
        flops=int(B * 3 * 2 * S * Dp * Dp),
        transcendentals=0,
        bytes_accessed=int(B * S * Dp * cbytes            # x read once
                           + 3 * Dp * Dp * cbytes         # weights read once
                           + 3 * Dp * 4                   # biases
                           + 3 * B * S * Dp * cbytes))    # q, k, v written once

    seq_spec = pl.BlockSpec((1, ts, Dp), lambda b, si: (b, si, 0))
    w_spec = _block_spec((Dp, Dp), lambda b, si: (0, 0), buffer_count=1)
    b_spec = _block_spec((1, Dp), lambda b, si: (0, 0), buffer_count=1)
    qkv_shape = jax.ShapeDtypeStruct((B, S, Dp), compute_dtype)

    q, k, v = pl.pallas_call(
        _qkv_proj_kernel,
        out_shape=(qkv_shape, qkv_shape, qkv_shape),
        grid_spec=pltpu.PrefetchScalarGridSpec(
            num_scalar_prefetch=0,
            grid=(B, S // ts),
            in_specs=[seq_spec, w_spec, w_spec, w_spec, b_spec, b_spec, b_spec],
            out_specs=(seq_spec, seq_spec, seq_spec),
        ),
        compiler_params=pltpu.CompilerParams(
            dimension_semantics=("parallel", "parallel"),
            vmem_limit_bytes=vmem_limit),
        cost_estimate=proj_cost,
    )(xp, wqp, wkp, wvp, bqp, bkp, bvp)

    # ------------------- stage 2: flash attention over projected Q/K/V -------------
    tq = _pick_tile(S, tq_target, row_mult)
    tk = _pick_tile(S, tk_target, row_mult)
    q_tiles, kv_tiles = S // tq, S // tk

    attn_cost = pl.CostEstimate(
        flops=int(B * 2 * 2 * S * S * Dp),
        transcendentals=int(B * S * S),
        bytes_accessed=int(B * S * Dp * cbytes                   # q read once
                           + 2 * q_tiles * B * S * Dp * cbytes   # k, v re-read per q tile
                           + B * S * Dp * x.dtype.itemsize))     # output

    kv_buffers = 3 if kv_tiles >= 3 else None   # hide HBM latency on the kv stream

    out = pl.pallas_call(
        functools.partial(_flash_attn_kernel,
                          approx_recip=(cdt != np.dtype(jnp.float32))),
        out_shape=jax.ShapeDtypeStruct((B, S, Dp), x.dtype),
        grid_spec=pltpu.PrefetchScalarGridSpec(
            num_scalar_prefetch=0,
            grid=(B, q_tiles, kv_tiles),
            in_specs=[
                pl.BlockSpec((1, tq, Dp), lambda b, qi, ki: (b, qi, 0)),
                _block_spec((1, tk, Dp), lambda b, qi, ki: (b, ki, 0), kv_buffers),
                _block_spec((1, tk, Dp), lambda b, qi, ki: (b, ki, 0), kv_buffers),
            ],
            out_specs=pl.BlockSpec((1, tq, Dp), lambda b, qi, ki: (b, qi, 0)),
            scratch_shapes=[
                pltpu.VMEM((tq, 1), jnp.float32),    # running max m
                pltpu.VMEM((tq, 1), jnp.float32),    # running sum l
                pltpu.VMEM((tq, Dp), jnp.float32),   # output accumulator
            ],
        ),
        compiler_params=pltpu.CompilerParams(
            dimension_semantics=("parallel", "parallel", "arbitrary"),
            vmem_limit_bytes=vmem_limit),
        cost_estimate=attn_cost,
    )(q, k, v)

    # TODO(synk): if the caller tolerates the Dp-padded (or bf16) layout, return
    # `out` directly and skip this HBM->HBM slice pass.
    return out[..., :D] if pad else out


def self_attention_ref(x, wq, bq, wk, bk, wv, bv):
    """Pure-JAX reference matching the PyTorch forward."""
    q = x @ wq.T + bq
    k = x @ wk.T + bk
    v = x @ wv.T + bv
    scores = jnp.einsum("bqd,bkd->bqk", q, k) / (x.shape[-1] ** 0.5)
    attn = jax.nn.softmax(scores, axis=-1)
    return jnp.einsum("bqk,bkd->bqd", attn, v)


if __name__ == "__main__":
    B, S, D = 2, 8, 32
    key = jax.random.PRNGKey(0)
    kx, kwq, kbq, kwk, kbk, kwv, kbv = jax.random.split(key, 7)

    x = jax.random.normal(kx, (B, S, D), dtype=jnp.float32)
    # PyTorch nn.Linear shapes: weight (D, D), bias (D,)
    bound = 1.0 / (D ** 0.5)
    wq = jax.random.uniform(kwq, (D, D), jnp.float32, -bound, bound)
    bq = jax.random.uniform(kbq, (D,), jnp.float32, -bound, bound)
    wk = jax.random.uniform(kwk, (D, D), jnp.float32, -bound, bound)
    bk = jax.random.uniform(kbk, (D,), jnp.float32, -bound, bound)
    wv = jax.random.uniform(kwv, (D, D), jnp.float32, -bound, bound)
    bv = jax.random.uniform(kbv, (D,), jnp.float32, -bound, bound)

    ref = self_attention_ref(x, wq, bq, wk, bk, wv, bv)

    # Fast path: bf16 MXU operands, f32 accumulation + f32 softmax.
    out_bf16 = jax.block_until_ready(
        self_attention(x, wq, bq, wk, bk, wv, bv, compute_dtype=jnp.bfloat16))
    assert out_bf16.shape == (B, S, D)
    assert jnp.allclose(out_bf16, ref, atol=5e-2, rtol=5e-2)

    # f32 path (tolerance covers possible multi-pass MXU lowering of f32 matmuls).
    out_f32 = jax.block_until_ready(
        self_attention(x, wq, bq, wk, bk, wv, bv, compute_dtype=jnp.float32))
    assert out_f32.shape == (B, S, D)
    assert jnp.allclose(out_f32, ref, atol=1e-2, rtol=1e-2)

    print("KERNEL_OK")
</pallas_src>

<mosaic_0001>
module attributes {stable_mosaic.version = 11 : i64} {
  func.func @_qkv_proj_kernel(%arg0: i32, %arg1: i32, %arg2: memref<1x8x128xbf16, #tpu.memory_space<vmem>>, %arg3: memref<128x128xbf16, #tpu.memory_space<vmem>>, %arg4: memref<128x128xbf16, #tpu.memory_space<vmem>>, %arg5: memref<128x128xbf16, #tpu.memory_space<vmem>>, %arg6: memref<1x128xf32, #tpu.memory_space<vmem>>, %arg7: memref<1x128xf32, #tpu.memory_space<vmem>>, %arg8: memref<1x128xf32, #tpu.memory_space<vmem>>, %arg9: memref<1x8x128xbf16, #tpu.memory_space<vmem>>, %arg10: memref<1x8x128xbf16, #tpu.memory_space<vmem>>, %arg11: memref<1x8x128xbf16, #tpu.memory_space<vmem>>) attributes {dimension_semantics = [#tpu.dimension_semantics<parallel>, #tpu.dimension_semantics<parallel>], iteration_bounds = array<i64: 2, 1>, scalar_prefetch = 0 : i64, scratch_operands = 0 : i64, tpu.core_type = #tpu.core_type<tc>, window_params = [{transform_indices = @transform_0, window_bounds = array<i64: 1, 8, 128>}, {pipeline_mode = #tpu.pipeline_mode<synchronous>, transform_indices = @transform_1, window_bounds = array<i64: 128, 128>}, {pipeline_mode = #tpu.pipeline_mode<synchronous>, transform_indices = @transform_2, window_bounds = array<i64: 128, 128>}, {pipeline_mode = #tpu.pipeline_mode<synchronous>, transform_indices = @transform_3, window_bounds = array<i64: 128, 128>}, {pipeline_mode = #tpu.pipeline_mode<synchronous>, transform_indices = @transform_4, window_bounds = array<i64: 1, 128>}, {pipeline_mode = #tpu.pipeline_mode<synchronous>, transform_indices = @transform_5, window_bounds = array<i64: 1, 128>}, {pipeline_mode = #tpu.pipeline_mode<synchronous>, transform_indices = @transform_6, window_bounds = array<i64: 1, 128>}, {transform_indices = @transform_7, window_bounds = array<i64: 1, 8, 128>}, {transform_indices = @transform_8, window_bounds = array<i64: 1, 8, 128>}, {transform_indices = @transform_9, window_bounds = array<i64: 1, 8, 128>}]} {
    %c0 = arith.constant 0 : index
    %c0_0 = arith.constant 0 : index
    %c0_1 = arith.constant 0 : index
    %0 = vector.load %arg2[%c0, %c0_0, %c0_1] : memref<1x8x128xbf16, #tpu.memory_space<vmem>>, vector<1x8x128xbf16>
    %1 = vector.shape_cast %0 : vector<1x8x128xbf16> to vector<8x128xbf16>
    %c0_2 = arith.constant 0 : index
    %c0_3 = arith.constant 0 : index
    %2 = vector.load %arg3[%c0_2, %c0_3] : memref<128x128xbf16, #tpu.memory_space<vmem>>, vector<128x128xbf16>
    %cst = arith.constant dense<0.000000e+00> : vector<8x128xf32>
    %3 = tpu.matmul %1, %2, %cst {dimension_numbers = #tpu.dot_dimension_numbers<[1], [0], [0], [1], [0, 0, 1, 1], [], []>} : vector<8x128xbf16>, vector<128x128xbf16>, vector<8x128xf32> -> vector<8x128xf32>
    %c0_4 = arith.constant 0 : index
    %c0_5 = arith.constant 0 : index
    %4 = vector.load %arg6[%c0_4, %c0_5] : memref<1x128xf32, #tpu.memory_space<vmem>>, vector<1x128xf32>
    %5 = vector.broadcast %4 : vector<1x128xf32> to vector<8x128xf32>
    %6 = arith.addf %3, %5 : vector<8x128xf32>
    %7 = arith.truncf %6 : vector<8x128xf32> to vector<8x128xbf16>
    %c0_6 = arith.constant 0 : index
    %c0_7 = arith.constant 0 : index
    %c0_8 = arith.constant 0 : index
    %8 = vector.load %arg9[%c0_6, %c0_7, %c0_8] : memref<1x8x128xbf16, #tpu.memory_space<vmem>>, vector<1x8x128xbf16>
    %9 = vector.shape_cast %8 : vector<1x8x128xbf16> to vector<8x128xbf16>
    %10 = vector.shape_cast %7 : vector<8x128xbf16> to vector<1x8x128xbf16>
    tpu.vector_store %arg9[%c0_6, %c0_7, %c0_8], %10 {strides = array<i32>} : memref<1x8x128xbf16, #tpu.memory_space<vmem>>, vector<1x8x128xbf16>,
    %c0_9 = arith.constant 0 : index
    %c0_10 = arith.constant 0 : index
    %11 = vector.load %arg4[%c0_9, %c0_10] : memref<128x128xbf16, #tpu.memory_space<vmem>>, vector<128x128xbf16>
    %cst_11 = arith.constant dense<0.000000e+00> : vector<8x128xf32>
    %12 = tpu.matmul %1, %11, %cst_11 {dimension_numbers = #tpu.dot_dimension_numbers<[1], [0], [0], [1], [0, 0, 1, 1], [], []>} : vector<8x128xbf16>, vector<128x128xbf16>, vector<8x128xf32> -> vector<8x128xf32>
    %c0_12 = arith.constant 0 : index
    %c0_13 = arith.constant 0 : index
    %13 = vector.load %arg7[%c0_12, %c0_13] : memref<1x128xf32, #tpu.memory_space<vmem>>, vector<1x128xf32>
    %14 = vector.broadcast %13 : vector<1x128xf32> to vector<8x128xf32>
    %15 = arith.addf %12, %14 : vector<8x128xf32>
    %16 = arith.truncf %15 : vector<8x128xf32> to vector<8x128xbf16>
    %c0_14 = arith.constant 0 : index
    %c0_15 = arith.constant 0 : index
    %c0_16 = arith.constant 0 : index
    %17 = vector.load %arg10[%c0_14, %c0_15, %c0_16] : memref<1x8x128xbf16, #tpu.memory_space<vmem>>, vector<1x8x128xbf16>
    %18 = vector.shape_cast %17 : vector<1x8x128xbf16> to vector<8x128xbf16>
    %19 = vector.shape_cast %16 : vector<8x128xbf16> to vector<1x8x128xbf16>
    tpu.vector_store %arg10[%c0_14, %c0_15, %c0_16], %19 {strides = array<i32>} : memref<1x8x128xbf16, #tpu.memory_space<vmem>>, vector<1x8x128xbf16>,
    %c0_17 = arith.constant 0 : index
    %c0_18 = arith.constant 0 : index
    %20 = vector.load %arg5[%c0_17, %c0_18] : memref<128x128xbf16, #tpu.memory_space<vmem>>, vector<128x128xbf16>
    %cst_19 = arith.constant dense<0.000000e+00> : vector<8x128xf32>
    %21 = tpu.matmul %1, %20, %cst_19 {dimension_numbers = #tpu.dot_dimension_numbers<[1], [0], [0], [1], [0, 0, 1, 1], [], []>} : vector<8x128xbf16>, vector<128x128xbf16>, vector<8x128xf32> -> vector<8x128xf32>
    %c0_20 = arith.constant 0 : index
    %c0_21 = arith.constant 0 : index
    %22 = vector.load %arg8[%c0_20, %c0_21] : memref<1x128xf32, #tpu.memory_space<vmem>>, vector<1x128xf32>
    %23 = vector.broadcast %22 : vector<1x128xf32> to vector<8x128xf32>
    %24 = arith.addf %21, %23 : vector<8x128xf32>
    %25 = arith.truncf %24 : vector<8x128xf32> to vector<8x128xbf16>
    %c0_22 = arith.constant 0 : index
    %c0_23 = arith.constant 0 : index
    %c0_24 = arith.constant 0 : index
    %26 = vector.load %arg11[%c0_22, %c0_23, %c0_24] : memref<1x8x128xbf16, #tpu.memory_space<vmem>>, vector<1x8x128xbf16>
    %27 = vector.shape_cast %26 : vector<1x8x128xbf16> to vector<8x128xbf16>
    %28 = vector.shape_cast %25 : vector<8x128xbf16> to vector<1x8x128xbf16>
    tpu.vector_store %arg11[%c0_22, %c0_23, %c0_24], %28 {strides = array<i32>} : memref<1x8x128xbf16, #tpu.memory_space<vmem>>, vector<1x8x128xbf16>,
    return
  }
  func.func @transform_0(%arg0: i32, %arg1: i32) -> (i32, i32, i32) {
    %c0_i32 = arith.constant 0 : i32
    %c0_i32_0 = arith.constant 0 : i32
    return %arg0, %arg1, %c0_i32 : i32, i32, i32
  }
  func.func @transform_1(%arg0: i32, %arg1: i32) -> (i32, i32) {
    %c0_i32 = arith.constant 0 : i32
    %c0_i32_0 = arith.constant 0 : i32
    %c0_i32_1 = arith.constant 0 : i32
    return %c0_i32, %c0_i32_0 : i32, i32
  }
  func.func @transform_2(%arg0: i32, %arg1: i32) -> (i32, i32) {
    %c0_i32 = arith.constant 0 : i32
    %c0_i32_0 = arith.constant 0 : i32
    %c0_i32_1 = arith.constant 0 : i32
    return %c0_i32, %c0_i32_0 : i32, i32
  }
  func.func @transform_3(%arg0: i32, %arg1: i32) -> (i32, i32) {
    %c0_i32 = arith.constant 0 : i32
    %c0_i32_0 = arith.constant 0 : i32
    %c0_i32_1 = arith.constant 0 : i32
    return %c0_i32, %c0_i32_0 : i32, i32
  }
  func.func @transform_4(%arg0: i32, %arg1: i32) -> (i32, i32) {
    %c0_i32 = arith.constant 0 : i32
    %c0_i32_0 = arith.constant 0 : i32
    %c0_i32_1 = arith.constant 0 : i32
    return %c0_i32, %c0_i32_0 : i32, i32
  }
  func.func @transform_5(%arg0: i32, %arg1: i32) -> (i32, i32) {
    %c0_i32 = arith.constant 0 : i32
    %c0_i32_0 = arith.constant 0 : i32
    %c0_i32_1 = arith.constant 0 : i32
    return %c0_i32, %c0_i32_0 : i32, i32
  }
  func.func @transform_6(%arg0: i32, %arg1: i32) -> (i32, i32) {
    %c0_i32 = arith.constant 0 : i32
    %c0_i32_0 = arith.constant 0 : i32
    %c0_i32_1 = arith.constant 0 : i32
    return %c0_i32, %c0_i32_0 : i32, i32
  }
  func.func @transform_7(%arg0: i32, %arg1: i32) -> (i32, i32, i32) {
    %c0_i32 = arith.constant 0 : i32
    %c0_i32_0 = arith.constant 0 : i32
    return %arg0, %arg1, %c0_i32 : i32, i32, i32
  }
  func.func @transform_8(%arg0: i32, %arg1: i32) -> (i32, i32, i32) {
    %c0_i32 = arith.constant 0 : i32
    %c0_i32_0 = arith.constant 0 : i32
    return %arg0, %arg1, %c0_i32 : i32, i32, i32
  }
  func.func @transform_9(%arg0: i32, %arg1: i32) -> (i32, i32, i32) {
    %c0_i32 = arith.constant 0 : i32
    %c0_i32_0 = arith.constant 0 : i32
    return %arg0, %arg1, %c0_i32 : i32, i32, i32
  }
}

</mosaic_0001>

<llo_original>
// kernel: tpu_custom_call.1
$region0: #{tpu_custom_call.1}
  #allocation0 [shape = 'u32[]', space=smem, size = 0x4, offset = 0x4, fixed_abs, tag = 'smem constant byte address 0x4 - core index']
  #allocation1 [shape = 'u32[144,128]{1,0:T(1,128)}', space=vmem, size = 0x12000, scoped, tag = 'internal scratch']
  %s0 = inlined_call_operand.hbm [shape: bf16[2,8,128], index: 0, kind: input, shape index: {}]
  %s1 = inlined_call_operand.hbm [shape: bf16[128,128], index: 1, kind: input, shape index: {}]
  %s2 = inlined_call_operand.hbm [shape: bf16[128,128], index: 2, kind: input, shape index: {}]
  %s3 = inlined_call_operand.hbm [shape: bf16[128,128], index: 3, kind: input, shape index: {}]
  %s4 = inlined_call_operand.vmem [shape: f32[1,128], index: 4, kind: input, shape index: {}]
  %s5 = inlined_call_operand.vmem [shape: f32[1,128], index: 5, kind: input, shape index: {}]
  %s6 = inlined_call_operand.vmem [shape: f32[1,128], index: 6, kind: input, shape index: {}]
  %s7 = inlined_call_operand.hbm [shape: bf16[2,8,128], index: 7, kind: output, shape index: {0}]
  %s8 = inlined_call_operand.hbm [shape: bf16[2,8,128], index: 8, kind: output, shape index: {1}]
  %s9 = inlined_call_operand.hbm [shape: bf16[2,8,128], index: 9, kind: output, shape index: {2}]
  %10 = xla_tuple %s7, %s8, %s9
  %s11 = sld [smem:[#allocation0]]
  $region93: #{tpu_custom_call.1} parent=0
    _
  %s13 = ssub.s32 1, %s11
  %s14 = scalar_select 0, %s13, %s11
  $region1: #{tpu_custom_call.1} parent=0
    #allocation2 [shape = 'u8[4096]{0}', space=vmem, size = 0x1000, scoped, tag = 'input window, operand 0']
    #allocation3 [shape = 's32[2]{0}', space=sflag, size = 0x8, scoped, tag = 'scoped memory for tpu_custom_call.1']
    #allocation4 [shape = 's32[2]{0}', space=sflag, size = 0x8, scoped, tag = 'scoped memory for tpu_custom_call.1']
    #allocation5 [shape = 'u8[32768]{0}', space=vmem, size = 0x8000, scoped, tag = 'input window, operand 1, single buffered']
    #allocation6 [shape = 's32[1]{0}', space=sflag, size = 0x4, scoped, tag = 'scoped memory for tpu_custom_call.1']
    #allocation7 [shape = 'u8[32768]{0}', space=vmem, size = 0x8000, scoped, tag = 'input window, operand 2, single buffered']
    #allocation8 [shape = 'u8[32768]{0}', space=vmem, size = 0x8000, scoped, tag = 'input window, operand 3, single buffered']
    #allocation9 [shape = 's32[1]{0}', space=sflag, size = 0x4, scoped, tag = 'scoped memory for tpu_custom_call.1']
    #allocation10 [shape = 'u8[4096]{0}', space=vmem, size = 0x1000, scoped, tag = 'output window, operand 0']
    #allocation11 [shape = 'u8[4096]{0}', space=vmem, size = 0x1000, scoped, tag = 'output window, operand 1']
    #allocation12 [shape = 's32[2]{0}', space=sflag, size = 0x8, scoped, tag = 'scoped memory for tpu_custom_call.1']
    #allocation13 [shape = 'u8[4096]{0}', space=vmem, size = 0x1000, scoped, tag = 'output window, operand 2']
    %15 = vsyncpa [#allocation3], 0
    %s16 = scalar_lea.sflag [#allocation3], 1
    %17 = vsyncpa %s16, 0
    %18 = vsyncpa [#allocation6], 0
    %19 = vsyncpa [#allocation9], 0
    %20 = vsyncpa [#allocation4], 0
    %s21 = scalar_lea.sflag [#allocation4], 1
    %22 = vsyncpa %s21, 0
    %23 = vsyncpa [#allocation12], 0
    %s24 = scalar_lea.sflag [#allocation12], 1
    %25 = vsyncpa %s24, 0
    loop: start=0, step=1, limit=4
    $region2: #{tpu_custom_call.1} parent=1 // loop_pre_header
      _
    $region3: #{tpu_custom_call.1} parent=1 // loop_header
      %s27 = sphi 0, %s31
      %p28 = scmp.ge.s32.totalorder %s27, 4
      %s34 = sphi 0, %s46
      %s35 = sphi 0, %s42
      %s36 = sphi 0, %s34
      %s37 = sphi 0, %s35
      %s38 = sphi 0, %s36
      %s39 = sphi 0, %s37
      %s51 = sphi 0, %s53
      %s54 = sphi 0, %s51
      %s55 = sphi 0, %s54
      %s71 = sphi 0, %s55
      %s75 = sphi 0, %s75
      %s77 = sphi 0, %s75
      %s78 = sphi 0, %s77
      %s92 = sphi 0, %s78
      %s96 = sphi 0, %s96
      %s98 = sphi 0, %s96
      %s99 = sphi 0, %s98
      %s113 = sphi 0, %s99
      %s117 = sphi 0, %s117
      %s119 = sphi 0, %s117
      %s120 = sphi 0, %s119
      %s134 = sphi 0, %s120
      %s138 = sphi 0, %s138
      %s140 = sphi 0, %s138
      %s141 = sphi 0, %s140
      %s155 = sphi 0, %s141
      %s159 = sphi 0, %s159
      %s161 = sphi 0, %s159
      %s162 = sphi 0, %s161
      %s176 = sphi 0, %s162
      %s180 = sphi 0, %s180
      %s182 = sphi 0, %s180
      %s183 = sphi 0, %s182
      %s197 = sphi 0, %s183
      %s205 = sphi 0, %s207
      %s208 = sphi 0, %s205
      %s209 = sphi 0, %s208
      %s225 = sphi 0, %s209
      %s233 = sphi 0, %s235
      %s236 = sphi 0, %s233
      %s237 = sphi 0, %s236
      %s253 = sphi 0, %s237
      %s261 = sphi 0, %s263
      %s264 = sphi 0, %s261
      %s265 = sphi 0, %s264
      %s281 = sphi 0, %s265
    $region4: #{tpu_custom_call.1} parent=1 // loop_header_branch
      %30 = sbr.rel (%p28) target = $region8
    $region5: #{tpu_custom_call.1} parent=1 // loop_body
      %s32 = ssub.s32 %s27, 1
      %s33 = ssub.s32 %s27, 2
      %s40 = sadd.s32 1, %s35
      %p41 = scmp.ge.s32.totalorder %s40, 1
      %s42 = scalar_select %p41, 0, %s40
      %s43 = sadd.s32 1, %s34
      %s44 = scalar_select %p41, %s43, %s34
      %p45 = scmp.ge.s32.totalorder %s44, 2
      %s46 = scalar_select %p45, 0, %s44
      %s47 = ssub.s32 %s34, %s46
      %s48 = ssub.s32 %s35, %s42
      %s49 = sor.u32 %s47, %s48
      %p50 = scmp.eq.s32.totalorder %s49, 0
      %s52 = sadd.s32 %s51, 1
      %s53 = scalar_select %p50, %s51, %s52
      %p56 = pneg %p50
      %p57 = scmp.eq.s32.totalorder %s27, 1
      %p58 = por %p56, %p57
      %p59 = scmp.ne.s32.totalorder %s51, %s54
      %p60 = scmp.eq.s32.totalorder %s27, 0
      %p61 = por %p59, %p60
      %p62 = scmp.ne.s32.totalorder %s51, %s54
      %p63 = scmp.eq.s32.totalorder %s32, 1
      %p64 = por %p62, %p63
      %p65 = scmp.ne.s32.totalorder %s54, %s55
      %p66 = scmp.eq.s32.totalorder %s32, 0
      %p67 = por %p65, %p66
      %p68 = scmp.ne.s32.totalorder %s54, %s55
      %p69 = scmp.eq.s32.totalorder %s33, 1
      %p70 = por %p68, %p69
      %p72 = scmp.ne.s32.totalorder %s55, %s71
      %p73 = scmp.eq.s32.totalorder %s33, 0
      %p74 = por %p72, %p73
      %s76 = sadd.s32 %s75, 1
      %p79 = scmp.eq.s32.totalorder %s27, 1
      %p80 = scmp.ne.s32.totalorder %s75, %s77
      %p81 = scmp.eq.s32.totalorder %s27, 0
      %p82 = por %p80, %p81
      %p83 = scmp.ne.s32.totalorder %s75, %s77
      %p84 = scmp.eq.s32.totalorder %s32, 1
      %p85 = por %p83, %p84
      %p86 = scmp.ne.s32.totalorder %s77, %s78
      %p87 = scmp.eq.s32.totalorder %s32, 0
      %p88 = por %p86, %p87
      %p89 = scmp.ne.s32.totalorder %s77, %s78
      %p90 = scmp.eq.s32.totalorder %s33, 1
      %p91 = por %p89, %p90
      %p93 = scmp.ne.s32.totalorder %s78, %s92
      %p94 = scmp.eq.s32.totalorder %s33, 0
      %p95 = por %p93, %p94
      %s97 = sadd.s32 %s96, 1
      %p100 = scmp.eq.s32.totalorder %s27, 1
      %p101 = scmp.ne.s32.totalorder %s96, %s98
      %p102 = scmp.eq.s32.totalorder %s27, 0
      %p103 = por %p101, %p102
      %p104 = scmp.ne.s32.totalorder %s96, %s98
      %p105 = scmp.eq.s32.totalorder %s32, 1
      %p106 = por %p104, %p105
      %p107 = scmp.ne.s32.totalorder %s98, %s99
      %p108 = scmp.eq.s32.totalorder %s32, 0
      %p109 = por %p107, %p108
      %p110 = scmp.ne.s32.totalorder %s98, %s99
      %p111 = scmp.eq.s32.totalorder %s33, 1
      %p112 = por %p110, %p111
      %p114 = scmp.ne.s32.totalorder %s99, %s113
      %p115 = scmp.eq.s32.totalorder %s33, 0
      %p116 = por %p114, %p115
      %s118 = sadd.s32 %s117, 1
      %p121 = scmp.eq.s32.totalorder %s27, 1
      %p122 = scmp.ne.s32.totalorder %s117, %s119
      %p123 = scmp.eq.s32.totalorder %s27, 0
      %p124 = por %p122, %p123
      %p125 = scmp.ne.s32.totalorder %s117, %s119
      %p126 = scmp.eq.s32.totalorder %s32, 1
      %p127 = por %p125, %p126
      %p128 = scmp.ne.s32.totalorder %s119, %s120
      %p129 = scmp.eq.s32.totalorder %s32, 0
      %p130 = por %p128, %p129
      %p131 = scmp.ne.s32.totalorder %s119, %s120
      %p132 = scmp.eq.s32.totalorder %s33, 1
      %p133 = por %p131, %p132
      %p135 = scmp.ne.s32.totalorder %s120, %s134
      %p136 = scmp.eq.s32.totalorder %s33, 0
      %p137 = por %p135, %p136
      %s139 = sadd.s32 %s138, 1
      %p142 = scmp.eq.s32.totalorder %s27, 1
      %p143 = scmp.ne.s32.totalorder %s138, %s140
      %p144 = scmp.eq.s32.totalorder %s27, 0
      %p145 = por %p143, %p144
      %p146 = scmp.ne.s32.totalorder %s138, %s140
      %p147 = scmp.eq.s32.totalorder %s32, 1
      %p148 = por %p146, %p147
      %p149 = scmp.ne.s32.totalorder %s140, %s141
      %p150 = scmp.eq.s32.totalorder %s32, 0
      %p151 = por %p149, %p150
      %p152 = scmp.ne.s32.totalorder %s140, %s141
      %p153 = scmp.eq.s32.totalorder %s33, 1
      %p154 = por %p152, %p153
      %p156 = scmp.ne.s32.totalorder %s141, %s155
      %p157 = scmp.eq.s32.totalorder %s33, 0
      %p158 = por %p156, %p157
      %s160 = sadd.s32 %s159, 1
      %p163 = scmp.eq.s32.totalorder %s27, 1
      %p164 = scmp.ne.s32.totalorder %s159, %s161
      %p165 = scmp.eq.s32.totalorder %s27, 0
      %p166 = por %p164, %p165
      %p167 = scmp.ne.s32.totalorder %s159, %s161
      %p168 = scmp.eq.s32.totalorder %s32, 1
      %p169 = por %p167, %p168
      %p170 = scmp.ne.s32.totalorder %s161, %s162
      %p171 = scmp.eq.s32.totalorder %s32, 0
      %p172 = por %p170, %p171
      %p173 = scmp.ne.s32.totalorder %s161, %s162
      %p174 = scmp.eq.s32.totalorder %s33, 1
      %p175 = por %p173, %p174
      %p177 = scmp.ne.s32.totalorder %s162, %s176
      %p178 = scmp.eq.s32.totalorder %s33, 0
      %p179 = por %p177, %p178
      %s181 = sadd.s32 %s180, 1
      %p184 = scmp.eq.s32.totalorder %s27, 1
      %p185 = scmp.ne.s32.totalorder %s180, %s182
      %p186 = scmp.eq.s32.totalorder %s27, 0
      %p187 = por %p185, %p186
      %p188 = scmp.ne.s32.totalorder %s180, %s182
      %p189 = scmp.eq.s32.totalorder %s32, 1
      %p190 = por %p188, %p189
      %p191 = scmp.ne.s32.totalorder %s182, %s183
      %p192 = scmp.eq.s32.totalorder %s32, 0
      %p193 = por %p191, %p192
      %p194 = scmp.ne.s32.totalorder %s182, %s183
      %p195 = scmp.eq.s32.totalorder %s33, 1
      %p196 = por %p194, %p195
      %p198 = scmp.ne.s32.totalorder %s183, %s197
      %p199 = scmp.eq.s32.totalorder %s33, 0
      %p200 = por %p198, %p199
      %s201 = ssub.s32 %s34, %s46
      %s202 = ssub.s32 %s35, %s42
      %s203 = sor.u32 %s201, %s202
      %p204 = scmp.eq.s32.totalorder %s203, 0
      %s206 = sadd.s32 %s205, 1
      %s207 = scalar_select %p204, %s205, %s206
      %p210 = pneg %p204
      %p211 = scmp.eq.s32.totalorder %s27, 1
      %p212 = por %p210, %p211
      %p213 = scmp.ne.s32.totalorder %s205, %s208
      %p214 = scmp.eq.s32.totalorder %s27, 0
      %p215 = por %p213, %p214
      %p216 = scmp.ne.s32.totalorder %s205, %s208
      %p217 = scmp.eq.s32.totalorder %s32, 1
      %p218 = por %p216, %p217
      %p219 = scmp.ne.s32.totalorder %s208, %s209
      %p220 = scmp.eq.s32.totalorder %s32, 0
      %p221 = por %p219, %p220
      %p222 = scmp.ne.s32.totalorder %s208, %s209
      %p223 = scmp.eq.s32.totalorder %s33, 1
      %p224 = por %p222, %p223
      %p226 = scmp.ne.s32.totalorder %s209, %s225
      %p227 = scmp.eq.s32.totalorder %s33, 0
      %p228 = por %p226, %p227
      %s229 = ssub.s32 %s34, %s46
      %s230 = ssub.s32 %s35, %s42
      %s231 = sor.u32 %s229, %s230
      %p232 = scmp.eq.s32.totalorder %s231, 0
      %s234 = sadd.s32 %s233, 1
      %s235 = scalar_select %p232, %s233, %s234
      %p238 = pneg %p232
      %p239 = scmp.eq.s32.totalorder %s27, 1
      %p240 = por %p238, %p239
      %p241 = scmp.ne.s32.totalorder %s233, %s236
      %p242 = scmp.eq.s32.totalorder %s27, 0
      %p243 = por %p241, %p242
      %p244 = scmp.ne.s32.totalorder %s233, %s236
      %p245 = scmp.eq.s32.totalorder %s32, 1
      %p246 = por %p244, %p245
      %p247 = scmp.ne.s32.totalorder %s236, %s237
      %p248 = scmp.eq.s32.totalorder %s32, 0
      %p249 = por %p247, %p248
      %p250 = scmp.ne.s32.totalorder %s236, %s237
      %p251 = scmp.eq.s32.totalorder %s33, 1
      %p252 = por %p250, %p251
      %p254 = scmp.ne.s32.totalorder %s237, %s253
      %p255 = scmp.eq.s32.totalorder %s33, 0
      %p256 = por %p254, %p255
      %s257 = ssub.s32 %s34, %s46
      %s258 = ssub.s32 %s35, %s42
      %s259 = sor.u32 %s257, %s258
      %p260 = scmp.eq.s32.totalorder %s259, 0
      %s262 = sadd.s32 %s261, 1
      %s263 = scalar_select %p260, %s261, %s262
      %p266 = pneg %p260
      %p267 = scmp.eq.s32.totalorder %s27, 1
      %p268 = por %p266, %p267
      %p269 = scmp.ne.s32.totalorder %s261, %s264
      %p270 = scmp.eq.s32.totalorder %s27, 0
      %p271 = por %p269, %p270
      %p272 = scmp.ne.s32.totalorder %s261, %s264
      %p273 = scmp.eq.s32.totalorder %s32, 1
      %p274 = por %p272, %p273
      %p275 = scmp.ne.s32.totalorder %s264, %s265
      %p276 = scmp.eq.s32.totalorder %s32, 0
      %p277 = por %p275, %p276
      %p278 = scmp.ne.s32.totalorder %s264, %s265
      %p279 = scmp.eq.s32.totalorder %s33, 1
      %p280 = por %p278, %p279
      %p282 = scmp.ne.s32.totalorder %s265, %s281
      %p283 = scmp.eq.s32.totalorder %s33, 0
      %p284 = por %p282, %p283
      %p285 = scmp.le.s32.totalorder 1, %s27
      %p286 = scmp.lt.s32.totalorder %s27, 3
      %p287 = pnand %p285, %p286
      %p288 = pneg %p287
      // Predicated region
      $region9: #{tpu_custom_call.1} parent=5 // pred_check
        _
      $region10: #{tpu_custom_call.1} parent=5 // pred_check_branch
        %290 = sbr.rel (%p287) target = $region12
      $region11: #{tpu_custom_call.1} parent=5 // pred_region
        %s291 = ssub.s32 %s27, 1
        // Predicated region
        $region13: #{tpu_custom_call.1} parent=11 // pred_check
          %p292 = pneg %p88
        $region14: #{tpu_custom_call.1} parent=11 // pred_check_branch
          %294 = sbr.rel (%p292) target = $region16
        $region15: #{tpu_custom_call.1} parent=11 // pred_region
          %s296 = ssub.s32 1024, 1024
          %297 = vsyncadd [#allocation6], %s296
          %s298 = sshll.u32 [#allocation5], 4
          %s299 = int_to_ptr.vmem [resolvable:$true] %s298
          %304 = dma.hbm_to_vmem [thread:$0]  %s1, 1024, %s299, [#allocation6], 64, 64, 4
        $region16: #{tpu_custom_call.1} parent=11 // pred_fallthru
          _
        // Predicated region
        $region17: #{tpu_custom_call.1} parent=11 // pred_check
          %p305 = pneg %p109
        $region18: #{tpu_custom_call.1} parent=11 // pred_check_branch
          %307 = sbr.rel (%p305) target = $region20
        $region19: #{tpu_custom_call.1} parent=11 // pred_region
          %s309 = ssub.s32 1024, 1024
          %310 = vsyncadd [#allocation6], %s309
          %s311 = sshll.u32 [#allocation7], 4
          %s312 = int_to_ptr.vmem [resolvable:$true] %s311
          %317 = dma.hbm_to_vmem [thread:$0]  %s2, 1024, %s312, [#allocation6], 64, 64, 4
        $region20: #{tpu_custom_call.1} parent=11 // pred_fallthru
          _
        // Predicated region
        $region21: #{tpu_custom_call.1} parent=11 // pred_check
          %p318 = pneg %p130
        $region22: #{tpu_custom_call.1} parent=11 // pred_check_branch
          %320 = sbr.rel (%p318) target = $region24
        $region23: #{tpu_custom_call.1} parent=11 // pred_region
          %s322 = ssub.s32 1024, 1024
          %323 = vsyncadd [#allocation9], %s322
          %s324 = sshll.u32 [#allocation8], 4
          %s325 = int_to_ptr.vmem [resolvable:$true] %s324
          %330 = dma.hbm_to_vmem [thread:$0]  %s3, 1024, %s325, [#allocation9], 64, 64, 4
        $region24: #{tpu_custom_call.1} parent=11 // pred_fallthru
          _
        // Predicated region
        $region25: #{tpu_custom_call.1} parent=11 // pred_check
          %p331 = pneg %p151
        $region26: #{tpu_custom_call.1} parent=11 // pred_check_branch
          %333 = sbr.rel (%p331) target = $region28
        $region27: #{tpu_custom_call.1} parent=11 // pred_region
          _
        $region28: #{tpu_custom_call.1} parent=11 // pred_fallthru
          _
        // Predicated region
        $region29: #{tpu_custom_call.1} parent=11 // pred_check
          %p334 = pneg %p172
        $region30: #{tpu_custom_call.1} parent=11 // pred_check_branch
          %336 = sbr.rel (%p334) target = $region32
        $region31: #{tpu_custom_call.1} parent=11 // pred_region
          _
        $region32: #{tpu_custom_call.1} parent=11 // pred_fallthru
          _
        // Predicated region
        $region33: #{tpu_custom_call.1} parent=11 // pred_check
          %p337 = pneg %p193
        $region34: #{tpu_custom_call.1} parent=11 // pred_check_branch
          %339 = sbr.rel (%p337) target = $region36
        $region35: #{tpu_custom_call.1} parent=11 // pred_region
          _
        $region36: #{tpu_custom_call.1} parent=11 // pred_fallthru
          _
      $region12: #{tpu_custom_call.1} parent=5 // pred_fallthru
        _
      %p340 = scmp.lt.s32.totalorder %s27, 2
      // Predicated region
      $region37: #{tpu_custom_call.1} parent=5 // pred_check
        %p341 = pneg %p340
      $region38: #{tpu_custom_call.1} parent=5 // pred_check_branch
        %343 = sbr.rel (%p341) target = $region40
      $region39: #{tpu_custom_call.1} parent=5 // pred_region
        // Predicated region
        $region41: #{tpu_custom_call.1} parent=39 // pred_check
          %p344 = pneg %p61
        $region42: #{tpu_custom_call.1} parent=39 // pred_check_branch
          %346 = sbr.rel (%p344) target = $region44
        $region43: #{tpu_custom_call.1} parent=39 // pred_region
          %s347 = sand.u32 %s51, 1
          %s348 = scalar_lea.sflag [#allocation3], %s347
          %s349 = sand.u32 %s51, 1
          %s350 = smul.addr %s349, 4
          %s351 = scalar_lea.vmem [#allocation2], %s350
          %s353 = ssub.s32 64, 64
          %354 = vsyncadd %s348, %s353
          %s355 = sadd.s32 %s35, %s34
          %s356 = smul.addr %s355, 64
          %s357 = scalar_lea.hbm %s0, %s356
          %s359 = sshll.u32 %s351, 4
          %s360 = int_to_ptr.vmem [resolvable:$true] %s359
          %362 = dma.hbm_to_vmem [thread:$0]  %s357, 64, %s360, %s348
        $region44: #{tpu_custom_call.1} parent=39 // pred_fallthru
          _
      $region40: #{tpu_custom_call.1} parent=5 // pred_fallthru
        _
      %p363 = scmp.le.s32.totalorder 1, %s27
      %p364 = scmp.lt.s32.totalorder %s27, 3
      %p365 = pnand %p363, %p364
      %p366 = pneg %p365
      // Predicated region
      $region45: #{tpu_custom_call.1} parent=5 // pred_check
        _
      $region46: #{tpu_custom_call.1} parent=5 // pred_check_branch
        %368 = sbr.rel (%p365) target = $region48
      $region47: #{tpu_custom_call.1} parent=5 // pred_region
        %s369 = ssub.s32 %s27, 1
        %s370 = sand.u32 %s54, 1
        %s371 = scalar_lea.sflag [#allocation3], %s370
        %s372 = sand.u32 %s54, 1
        %s373 = smul.addr %s372, 4
        %s374 = scalar_lea.vmem [#allocation2], %s373
        // Predicated region
        $region49: #{tpu_custom_call.1} parent=47 // pred_check
          %p375 = pneg %p67
        $region50: #{tpu_custom_call.1} parent=47 // pred_check_branch
          %377 = sbr.rel (%p375) target = $region52
        $region51: #{tpu_custom_call.1} parent=47 // pred_region
          %378 = dma.done %s371, 64
        $region52: #{tpu_custom_call.1} parent=47 // pred_fallthru
          _
        // Predicated region
        $region53: #{tpu_custom_call.1} parent=47 // pred_check
          %p379 = pneg %p88
        $region54: #{tpu_custom_call.1} parent=47 // pred_check_branch
          %381 = sbr.rel (%p379) target = $region56
        $region55: #{tpu_custom_call.1} parent=47 // pred_region
          %382 = dma.done [#allocation6], 1024
        $region56: #{tpu_custom_call.1} parent=47 // pred_fallthru
          _
        // Predicated region
        $region57: #{tpu_custom_call.1} parent=47 // pred_check
          %p383 = pneg %p109
        $region58: #{tpu_custom_call.1} parent=47 // pred_check_branch
          %385 = sbr.rel (%p383) target = $region60
        $region59: #{tpu_custom_call.1} parent=47 // pred_region
          %386 = dma.done [#allocation6], 1024
        $region60: #{tpu_custom_call.1} parent=47 // pred_fallthru
          _
        // Predicated region
        $region61: #{tpu_custom_call.1} parent=47 // pred_check
          %p387 = pneg %p130
        $region62: #{tpu_custom_call.1} parent=47 // pred_check_branch
          %389 = sbr.rel (%p387) target = $region64
        $region63: #{tpu_custom_call.1} parent=47 // pred_region
          %390 = dma.done [#allocation9], 1024
        $region64: #{tpu_custom_call.1} parent=47 // pred_fallthru
          _
        %s391 = sand.u32 %s54, 1
        %s392 = scalar_lea.sflag [#allocation3], %s391
        %s393 = sand.u32 %s54, 1
        %s394 = smul.addr %s393, 4
        %s395 = scalar_lea.vmem [#allocation2], %s394
        %p396 = pneg %p67
        %p397 = pneg %p64
        %p398 = pneg %p88
        %p399 = pneg %p85
        %p400 = pneg %p109
        %p401 = pneg %p106
        %p402 = pneg %p130
        %p403 = pneg %p127
        %p404 = pneg %p151
        %p405 = pneg %p148
        %p406 = pneg %p172
        %p407 = pneg %p169
        %p408 = pneg %p193
        %p409 = pneg %p190
        %p410 = pneg %p221
        %p411 = pneg %p218
        %s412 = sand.u32 %s208, 1
        %s413 = scalar_lea.sflag [#allocation4], %s412
        %s414 = sand.u32 %s208, 1
        %s415 = smul.addr %s414, 4
        %s416 = scalar_lea.vmem [#allocation10], %s415
        %p417 = pneg %p249
        %p418 = pneg %p246
        %s419 = sand.u32 %s32, 1
        %s420 = scalar_lea.sflag [#allocation12], %s419
        %s421 = sand.u32 %s236, 1
        %s422 = smul.addr %s421, 4
        %s423 = scalar_lea.vmem [#allocation11], %s422
        %p424 = pneg %p277
        %p425 = pneg %p274
        %s426 = sand.u32 %s32, 1
        %s427 = scalar_lea.sflag [#allocation12], %s426
        %s428 = sand.u32 %s264, 1
        %s429 = smul.addr %s428, 4
        %s430 = scalar_lea.vmem [#allocation13], %s429
        %v432 = vld [vmem:[%s374] sm:$0xf]
        %v433 = vld [vmem:[#allocation5] sm:$0xf]
        %v434 = vld [vmem:[#allocation5 + $0x4] sm:$0xf]
        %v435 = vld [vmem:[#allocation5 + $0x8] sm:$0xf]
        %v436 = vld [vmem:[#allocation5 + $0xc] sm:$0xf]
        %v437 = vld [vmem:[#allocation5 + $0x10] sm:$0xf]
        %v438 = vld [vmem:[#allocation5 + $0x14] sm:$0xf]
        %v439 = vld [vmem:[#allocation5 + $0x18] sm:$0xf]
        %v440 = vld [vmem:[#allocation5 + $0x1c] sm:$0xf]
        %v441 = vld [vmem:[#allocation5 + $0x20] sm:$0xf]
        %v442 = vld [vmem:[#allocation5 + $0x24] sm:$0xf]
        %v443 = vld [vmem:[#allocation5 + $0x28] sm:$0xf]
        %v444 = vld [vmem:[#allocation5 + $0x2c] sm:$0xf]
        %v445 = vld [vmem:[#allocation5 + $0x30] sm:$0xf]
        %v446 = vld [vmem:[#allocation5 + $0x34] sm:$0xf]
        %v447 = vld [vmem:[#allocation5 + $0x38] sm:$0xf]
        %v448 = vld [vmem:[#allocation5 + $0x3c] sm:$0xf]
        %v449 = vld [vmem:[%s4] sm:$0x1]
        %v451 = vlaneseq
        %v452 = vshrl.u32 %v451, 7
        %v453 = vsub.s32 0, %v452
        %v454 = vrot.slane %v449, %v453
        %v472 = vunpack.c.l.b16 %v433
        %v473 = vunpack.c.l.b16 %v434
        %v474 = vunpack.c.l.b16 %v435
        %v475 = vunpack.c.l.b16 %v436
        %v476 = vunpack.c.l.b16 %v437
        %v477 = vunpack.c.l.b16 %v438
        %v478 = vunpack.c.l.b16 %v439
        %v479 = vunpack.c.l.b16 %v440
        %v480 = vunpack.c.l.b16 %v441
        %v481 = vunpack.c.l.b16 %v442
        %v482 = vunpack.c.l.b16 %v443
        %v483 = vunpack.c.l.b16 %v444
        %v484 = vunpack.c.l.b16 %v445
        %v485 = vunpack.c.l.b16 %v446
        %v486 = vunpack.c.l.b16 %v447
        %v487 = vunpack.c.l.b16 %v448
        %v488 = vpack.c.b16 %v473, %v472
        %v489 = vpack.c.b16 %v475, %v474
        %v490 = vpack.c.b16 %v477, %v476
        %v491 = vpack.c.b16 %v479, %v478
        %v492 = vpack.c.b16 %v481, %v480
        %v493 = vpack.c.b16 %v483, %v482
        %v494 = vpack.c.b16 %v485, %v484
        %v495 = vpack.c.b16 %v487, %v486
        %504 = vmatprep.subr.bf16.mxu0 0
        %505 = vmatpush1.bf16.msra.mxu0 %v488
        %506 = vmatprep.subr.bf16.mxu0 0
        %507 = vmatpush1.bf16.msra.mxu0 %v489
        %508 = vmatprep.subr.bf16.mxu0 0
        %509 = vmatpush1.bf16.msra.mxu0 %v490
        %510 = vmatprep.subr.bf16.mxu0 0
        %511 = vmatpush1.bf16.msra.mxu0 %v491
        %512 = vmatprep.subr.bf16.mxu0 0
        %513 = vmatpush1.bf16.msra.mxu0 %v492
        %514 = vmatprep.subr.bf16.mxu0 0
        %515 = vmatpush1.bf16.msra.mxu0 %v493
        %516 = vmatprep.subr.bf16.mxu0 0
        %517 = vmatpush1.bf16.msra.mxu0 %v494
        %518 = vmatprep.subr.bf16.mxu0 0
        %519 = vmatpush1.bf16.msra.mxu0 %v495
        %520 = vmatprep.subr.bf16.mxu0 0
        %521 = vmatpush1.bf16.msra.mxu0 0
        %522 = vmatprep.subr.bf16.mxu0 0
        %523 = vmatpush1.bf16.msra.mxu0 0
        %524 = vmatprep.subr.bf16.mxu0 0
        %525 = vmatpush1.bf16.msra.mxu0 0
        %526 = vmatprep.subr.bf16.mxu0 0
        %527 = vmatpush1.bf16.msra.mxu0 0
        %528 = vmatprep.subr.bf16.mxu0 0
        %529 = vmatpush1.bf16.msra.mxu0 0
        %530 = vmatprep.subr.bf16.mxu0 0
        %531 = vmatpush1.bf16.msra.mxu0 0
        %532 = vmatprep.subr.bf16.mxu0 0
        %533 = vmatpush1.bf16.msra.mxu0 0
        %534 = vmatprep.subr.bf16.mxu0 0
        %535 = vmatpush1.bf16.msra.mxu0 0
        %536 = vmatprep.mubr.bf16.mxu0 0
        %537 = vmatmul.mubr.bf16.gmra.mrb[0].mxu0 %v432
        %v538 = vpop.f32.mrb[0].mxu0
        %v539 = vadd.f32 %v454, %v538
        %v540 = vpop.f32.mrb[0].mxu0
        %v541 = vpop.f32.mrb[0].mxu0
        %v542 = vpop.f32.mrb[0].mxu0
        %543 = vdwg.mxu0
        %v544 = vpack.c.bf16 %v539, %v539
        %545 = vst [vmem:[%s416] sm:$0xf] %v544
        %v546 = vld [vmem:[#allocation7] sm:$0xf]
        %v547 = vld [vmem:[#allocation7 + $0x4] sm:$0xf]
        %v548 = vld [vmem:[#allocation7 + $0x8] sm:$0xf]
        %v549 = vld [vmem:[#allocation7 + $0xc] sm:$0xf]
        %v550 = vld [vmem:[#allocation7 + $0x10] sm:$0xf]
        %v551 = vld [vmem:[#allocation7 + $0x14] sm:$0xf]
        %v552 = vld [vmem:[#allocation7 + $0x18] sm:$0xf]
        %v553 = vld [vmem:[#allocation7 + $0x1c] sm:$0xf]
        %v554 = vld [vmem:[#allocation7 + $0x20] sm:$0xf]
        %v555 = vld [vmem:[#allocation7 + $0x24] sm:$0xf]
        %v556 = vld [vmem:[#allocation7 + $0x28] sm:$0xf]
        %v557 = vld [vmem:[#allocation7 + $0x2c] sm:$0xf]
        %v558 = vld [vmem:[#allocation7 + $0x30] sm:$0xf]
        %v559 = vld [vmem:[#allocation7 + $0x34] sm:$0xf]
        %v560 = vld [vmem:[#allocation7 + $0x38] sm:$0xf]
        %v561 = vld [vmem:[#allocation7 + $0x3c] sm:$0xf]
        %v562 = vld [vmem:[%s5] sm:$0x1]
        %v564 = vlaneseq
        %v565 = vshrl.u32 %v564, 7
        %v566 = vsub.s32 0, %v565
        %v567 = vrot.slane %v562, %v566
        %v585 = vunpack.c.l.b16 %v546
        %v586 = vunpack.c.l.b16 %v547
        %v587 = vunpack.c.l.b16 %v548
        %v588 = vunpack.c.l.b16 %v549
        %v589 = vunpack.c.l.b16 %v550
        %v590 = vunpack.c.l.b16 %v551
        %v591 = vunpack.c.l.b16 %v552
        %v592 = vunpack.c.l.b16 %v553
        %v593 = vunpack.c.l.b16 %v554
        %v594 = vunpack.c.l.b16 %v555
        %v595 = vunpack.c.l.b16 %v556
        %v596 = vunpack.c.l.b16 %v557
        %v597 = vunpack.c.l.b16 %v558
        %v598 = vunpack.c.l.b16 %v559
        %v599 = vunpack.c.l.b16 %v560
        %v600 = vunpack.c.l.b16 %v561
        %v601 = vpack.c.b16 %v586, %v585
        %v602 = vpack.c.b16 %v588, %v587
        %v603 = vpack.c.b16 %v590, %v589
        %v604 = vpack.c.b16 %v592, %v591
        %v605 = vpack.c.b16 %v594, %v593
        %v606 = vpack.c.b16 %v596, %v595
        %v607 = vpack.c.b16 %v598, %v597
        %v608 = vpack.c.b16 %v600, %v599
        %617 = vmatprep.subr.bf16.mxu0 0
        %618 = vmatpush1.bf16.msra.mxu0 %v601
        %619 = vmatprep.subr.bf16.mxu0 0
        %620 = vmatpush1.bf16.msra.mxu0 %v602
        %621 = vmatprep.subr.bf16.mxu0 0
        %622 = vmatpush1.bf16.msra.mxu0 %v603
        %623 = vmatprep.subr.bf16.mxu0 0
        %624 = vmatpush1.bf16.msra.mxu0 %v604
        %625 = vmatprep.subr.bf16.mxu0 0
        %626 = vmatpush1.bf16.msra.mxu0 %v605
        %627 = vmatprep.subr.bf16.mxu0 0
        %628 = vmatpush1.bf16.msra.mxu0 %v606
        %629 = vmatprep.subr.bf16.mxu0 0
        %630 = vmatpush1.bf16.msra.mxu0 %v607
        %631 = vmatprep.subr.bf16.mxu0 0
        %632 = vmatpush1.bf16.msra.mxu0 %v608
        %633 = vmatprep.subr.bf16.mxu0 0
        %634 = vmatpush1.bf16.msra.mxu0 0
        %635 = vmatprep.subr.bf16.mxu0 0
        %636 = vmatpush1.bf16.msra.mxu0 0
        %637 = vmatprep.subr.bf16.mxu0 0
        %638 = vmatpush1.bf16.msra.mxu0 0
        %639 = vmatprep.subr.bf16.mxu0 0
        %640 = vmatpush1.bf16.msra.mxu0 0
        %641 = vmatprep.subr.bf16.mxu0 0
        %642 = vmatpush1.bf16.msra.mxu0 0
        %643 = vmatprep.subr.bf16.mxu0 0
        %644 = vmatpush1.bf16.msra.mxu0 0
        %645 = vmatprep.subr.bf16.mxu0 0
        %646 = vmatpush1.bf16.msra.mxu0 0
        %647 = vmatprep.subr.bf16.mxu0 0
        %648 = vmatpush1.bf16.msra.mxu0 0
        %649 = vmatprep.mubr.bf16.mxu0 0
        %650 = vmatmul.mubr.bf16.gmra.mrb[0].mxu0 %v432
        %v651 = vpop.f32.mrb[0].mxu0
        %v652 = vadd.f32 %v567, %v651
        %v653 = vpop.f32.mrb[0].mxu0
        %v654 = vpop.f32.mrb[0].mxu0
        %v655 = vpop.f32.mrb[0].mxu0
        %656 = vdwg.mxu0
        %v657 = vpack.c.bf16 %v652, %v652
        %658 = vst [vmem:[%s423] sm:$0xf] %v657
        %v659 = vld [vmem:[#allocation8] sm:$0xf]
        %v660 = vld [vmem:[#allocation8 + $0x4] sm:$0xf]
        %v661 = vld [vmem:[#allocation8 + $0x8] sm:$0xf]
        %v662 = vld [vmem:[#allocation8 + $0xc] sm:$0xf]
        %v663 = vld [vmem:[#allocation8 + $0x10] sm:$0xf]
        %v664 = vld [vmem:[#allocation8 + $0x14] sm:$0xf]
        %v665 = vld [vmem:[#allocation8 + $0x18] sm:$0xf]
        %v666 = vld [vmem:[#allocation8 + $0x1c] sm:$0xf]
        %v667 = vld [vmem:[#allocation8 + $0x20] sm:$0xf]
        %v668 = vld [vmem:[#allocation8 + $0x24] sm:$0xf]
        %v669 = vld [vmem:[#allocation8 + $0x28] sm:$0xf]
        %v670 = vld [vmem:[#allocation8 + $0x2c] sm:$0xf]
        %v671 = vld [vmem:[#allocation8 + $0x30] sm:$0xf]
        %v672 = vld [vmem:[#allocation8 + $0x34] sm:$0xf]
        %v673 = vld [vmem:[#allocation8 + $0x38] sm:$0xf]
        %v674 = vld [vmem:[#allocation8 + $0x3c] sm:$0xf]
        %v675 = vld [vmem:[%s6] sm:$0x1]
        %v677 = vlaneseq
        %v678 = vshrl.u32 %v677, 7
        %v679 = vsub.s32 0, %v678
        %v680 = vrot.slane %v675, %v679
        %v698 = vunpack.c.l.b16 %v659
        %v699 = vunpack.c.l.b16 %v660
        %v700 = vunpack.c.l.b16 %v661
        %v701 = vunpack.c.l.b16 %v662
        %v702 = vunpack.c.l.b16 %v663
        %v703 = vunpack.c.l.b16 %v664
        %v704 = vunpack.c.l.b16 %v665
        %v705 = vunpack.c.l.b16 %v666
        %v706 = vunpack.c.l.b16 %v667
        %v707 = vunpack.c.l.b16 %v668
        %v708 = vunpack.c.l.b16 %v669
        %v709 = vunpack.c.l.b16 %v670
        %v710 = vunpack.c.l.b16 %v671
        %v711 = vunpack.c.l.b16 %v672
        %v712 = vunpack.c.l.b16 %v673
        %v713 = vunpack.c.l.b16 %v674
        %v714 = vpack.c.b16 %v699, %v698
        %v715 = vpack.c.b16 %v701, %v700
        %v716 = vpack.c.b16 %v703, %v702
        %v717 = vpack.c.b16 %v705, %v704
        %v718 = vpack.c.b16 %v707, %v706
        %v719 = vpack.c.b16 %v709, %v708
        %v720 = vpack.c.b16 %v711, %v710
        %v721 = vpack.c.b16 %v713, %v712
        %730 = vmatprep.subr.bf16.mxu0 0
        %731 = vmatpush1.bf16.msra.mxu0 %v714
        %732 = vmatprep.subr.bf16.mxu0 0
        %733 = vmatpush1.bf16.msra.mxu0 %v715
        %734 = vmatprep.subr.bf16.mxu0 0
        %735 = vmatpush1.bf16.msra.mxu0 %v716
        %736 = vmatprep.subr.bf16.mxu0 0
        %737 = vmatpush1.bf16.msra.mxu0 %v717
        %738 = vmatprep.subr.bf16.mxu0 0
        %739 = vmatpush1.bf16.msra.mxu0 %v718
        %740 = vmatprep.subr.bf16.mxu0 0
        %741 = vmatpush1.bf16.msra.mxu0 %v719
        %742 = vmatprep.subr.bf16.mxu0 0
        %743 = vmatpush1.bf16.msra.mxu0 %v720
        %744 = vmatprep.subr.bf16.mxu0 0
        %745 = vmatpush1.bf16.msra.mxu0 %v721
        %746 = vmatprep.subr.bf16.mxu0 0
        %747 = vmatpush1.bf16.msra.mxu0 0
        %748 = vmatprep.subr.bf16.mxu0 0
        %749 = vmatpush1.bf16.msra.mxu0 0
        %750 = vmatprep.subr.bf16.mxu0 0
        %751 = vmatpush1.bf16.msra.mxu0 0
        %752 = vmatprep.subr.bf16.mxu0 0
        %753 = vmatpush1.bf16.msra.mxu0 0
        %754 = vmatprep.subr.bf16.mxu0 0
        %755 = vmatpush1.bf16.msra.mxu0 0
        %756 = vmatprep.subr.bf16.mxu0 0
        %757 = vmatpush1.bf16.msra.mxu0 0
        %758 = vmatprep.subr.bf16.mxu0 0
        %759 = vmatpush1.bf16.msra.mxu0 0
        %760 = vmatprep.subr.bf16.mxu0 0
        %761 = vmatpush1.bf16.msra.mxu0 0
        %762 = vmatprep.mubr.bf16.mxu0 0
        %763 = vmatmul.mubr.bf16.gmra.mrb[0].mxu0 %v432
        %v764 = vpop.f32.mrb[0].mxu0
        %v765 = vadd.f32 %v680, %v764
        %v766 = vpop.f32.mrb[0].mxu0
        %v767 = vpop.f32.mrb[0].mxu0
        %v768 = vpop.f32.mrb[0].mxu0
        %769 = vdwg.mxu0
        %v770 = vpack.c.bf16 %v765, %v765
        %771 = vst [vmem:[%s430] sm:$0xf] %v770
        %s772 = sand.u32 %s208, 1
        %s773 = scalar_lea.sflag [#allocation4], %s772
        %s774 = sand.u32 %s208, 1
        %s775 = smul.addr %s774, 4
        %s776 = scalar_lea.vmem [#allocation10], %s775
        %s777 = sand.u32 %s32, 1
        %s778 = scalar_lea.sflag [#allocation12], %s777
        %s779 = sand.u32 %s236, 1
        %s780 = smul.addr %s779, 4
        %s781 = scalar_lea.vmem [#allocation11], %s780
        %s782 = sand.u32 %s32, 1
        %s783 = scalar_lea.sflag [#allocation12], %s782
        %s784 = sand.u32 %s264, 1
        %s785 = smul.addr %s784, 4
        %s786 = scalar_lea.vmem [#allocation13], %s785
        // Predicated region
        $region65: #{tpu_custom_call.1} parent=47 // pred_check
          %p787 = pneg %p218
        $region66: #{tpu_custom_call.1} parent=47 // pred_check_branch
          %789 = sbr.rel (%p787) target = $region68
        $region67: #{tpu_custom_call.1} parent=47 // pred_region
          %s791 = ssub.s32 64, 64
          %792 = vsyncadd %s773, %s791
          %s793 = sadd.s32 %s37, %s36
          %s794 = smul.addr %s793, 64
          %s795 = scalar_lea.hbm %s7, %s794
          %s797 = sshll.u32 %s776, 4
          %s798 = int_to_ptr.vmem [resolvable:$true] %s797
          %800 = dma.vmem_to_hbm [thread:$0]  %s798, 64, %s795, %s773
        $region68: #{tpu_custom_call.1} parent=47 // pred_fallthru
          _
        // Predicated region
        $region69: #{tpu_custom_call.1} parent=47 // pred_check
          %p801 = pneg %p246
        $region70: #{tpu_custom_call.1} parent=47 // pred_check_branch
          %803 = sbr.rel (%p801) target = $region72
        $region71: #{tpu_custom_call.1} parent=47 // pred_region
          %s805 = ssub.s32 64, 64
          %806 = vsyncadd %s778, %s805
          %s807 = sadd.s32 %s37, %s36
          %s808 = smul.addr %s807, 64
          %s809 = scalar_lea.hbm %s8, %s808
          %s811 = sshll.u32 %s781, 4
          %s812 = int_to_ptr.vmem [resolvable:$true] %s811
          %814 = dma.vmem_to_hbm [thread:$0]  %s812, 64, %s809, %s778
        $region72: #{tpu_custom_call.1} parent=47 // pred_fallthru
          _
        // Predicated region
        $region73: #{tpu_custom_call.1} parent=47 // pred_check
          %p815 = pneg %p274
        $region74: #{tpu_custom_call.1} parent=47 // pred_check_branch
          %817 = sbr.rel (%p815) target = $region76
        $region75: #{tpu_custom_call.1} parent=47 // pred_region
          %s819 = ssub.s32 64, 64
          %820 = vsyncadd %s783, %s819
          %s821 = sadd.s32 %s37, %s36
          %s822 = smul.addr %s821, 64
          %s823 = scalar_lea.hbm %s9, %s822
          %s825 = sshll.u32 %s786, 4
          %s826 = int_to_ptr.vmem [resolvable:$true] %s825
          %828 = dma.vmem_to_hbm [thread:$0]  %s826, 64, %s823, %s783
        $region76: #{tpu_custom_call.1} parent=47 // pred_fallthru
          _
      $region48: #{tpu_custom_call.1} parent=5 // pred_fallthru
        _
      %p829 = scmp.le.s32.totalorder 2, %s27
      // Predicated region
      $region77: #{tpu_custom_call.1} parent=5 // pred_check
        %p830 = pneg %p829
      $region78: #{tpu_custom_call.1} parent=5 // pred_check_branch
        %832 = sbr.rel (%p830) target = $region80
      $region79: #{tpu_custom_call.1} parent=5 // pred_region
        %s833 = ssub.s32 %s27, 2
        // Predicated region
        $region81: #{tpu_custom_call.1} parent=79 // pred_check
          %p834 = pneg %p224
        $region82: #{tpu_custom_call.1} parent=79 // pred_check_branch
          %836 = sbr.rel (%p834) target = $region84
        $region83: #{tpu_custom_call.1} parent=79 // pred_region
          %s837 = sand.u32 %s209, 1
          %s838 = scalar_lea.sflag [#allocation4], %s837
          %s839 = sand.u32 %s209, 1
          %s840 = smul.addr %s839, 4
          %s841 = scalar_lea.vmem [#allocation10], %s840
          %842 = dma.done %s838, 64
        $region84: #{tpu_custom_call.1} parent=79 // pred_fallthru
          _
        // Predicated region
        $region85: #{tpu_custom_call.1} parent=79 // pred_check
          %p843 = pneg %p252
        $region86: #{tpu_custom_call.1} parent=79 // pred_check_branch
          %845 = sbr.rel (%p843) target = $region88
        $region87: #{tpu_custom_call.1} parent=79 // pred_region
          %s846 = sand.u32 %s33, 1
          %s847 = scalar_lea.sflag [#allocation12], %s846
          %s848 = sand.u32 %s237, 1
          %s849 = smul.addr %s848, 4
          %s850 = scalar_lea.vmem [#allocation11], %s849
          %851 = dma.done %s847, 64
        $region88: #{tpu_custom_call.1} parent=79 // pred_fallthru
          _
        // Predicated region
        $region89: #{tpu_custom_call.1} parent=79 // pred_check
          %p852 = pneg %p280
        $region90: #{tpu_custom_call.1} parent=79 // pred_check_branch
          %854 = sbr.rel (%p852) target = $region92
        $region91: #{tpu_custom_call.1} parent=79 // pred_region
          %s855 = sand.u32 %s33, 1
          %s856 = scalar_lea.sflag [#allocation12], %s855
          %s857 = sand.u32 %s265, 1
          %s858 = smul.addr %s857, 4
          %s859 = scalar_lea.vmem [#allocation13], %s858
          %860 = dma.done %s856, 64
        $region92: #{tpu_custom_call.1} parent=79 // pred_fallthru
          _
      $region80: #{tpu_custom_call.1} parent=5 // pred_fallthru
        _
    $region6: #{tpu_custom_call.1} parent=1 // loop_footer
      %s31 = sadd.s32 1, %s27
    $region7: #{tpu_custom_call.1} parent=1 // loop_footer_branch
      %26 = sbr.rel target = $region3
    $region8: #{tpu_custom_call.1} parent=1 // loop_exit
      _
    %861 = vsyncpa [#allocation3], 1
    %s862 = scalar_lea.sflag [#allocation3], 1
    %863 = vsyncpa %s862, 1
    %864 = vsyncpa [#allocation6], 1
    %865 = vsyncpa [#allocation9], 1
    %866 = vsyncpa [#allocation4], 1
    %s867 = scalar_lea.sflag [#allocation4], 1
    %868 = vsyncpa %s867, 1
    %869 = vsyncpa [#allocation12], 1
    %s870 = scalar_lea.sflag [#allocation12], 1
    %871 = vsyncpa %s870, 1

</llo_original>
